<compile_context>
chip_gen: v5e
topology: v5e:2x2
jax: 0.10.0
libtpu: 0.0.40
codegen_flags: <defaults>
</compile_context>

<pallas_src>
import math
import functools

import jax
import jax.numpy as jnp
from jax import lax
from jax.experimental import pallas as pl
from jax.experimental.pallas import tpu as pltpu


# ----------------------------------------------------------------------------
# sinusoidal positional encoding (matches getPositionEncoding)
# ----------------------------------------------------------------------------
def get_position_encoding(seq_len, d, n=100000):
    k = jnp.arange(seq_len, dtype=jnp.float32)[:, None]
    div_term = jnp.exp(jnp.arange(0, d, 2, dtype=jnp.float32) * -(math.log(n) / d))
    pe = jnp.zeros((seq_len, d), dtype=jnp.float32)
    pe = pe.at[:, 0::2].set(jnp.sin(k * div_term))
    pe = pe.at[:, 1::2].set(jnp.cos(k * div_term[: d // 2]))  # odd-d safe
    return pe[None]  # (1, seq_len, d)


# ----------------------------------------------------------------------------
# phase A: K projection (row-parallel)
# ----------------------------------------------------------------------------
def kproj_kernel(x_ref, wk_ref, k_ref):
    k_ref[...] = jnp.dot(
        x_ref[...].astype(jnp.bfloat16), wk_ref[...],
        preferred_element_type=jnp.float32).astype(jnp.bfloat16)


# ----------------------------------------------------------------------------
# phase B: attention accumulation over query-row tiles (reduction axis)
# ----------------------------------------------------------------------------
def attn_kernel(x_ref,                 # (TJ, M) f32, per-tile
                k_ref,                 # (N_pad, M) bf16, resident
                wq_ref, wv_ref,        # (M, M) bf16, resident
                acc_ref,               # (N_pad, M) f32 output accumulator
                *, n_real):
    j = pl.program_id(0)

    xb = x_ref[...].astype(jnp.bfloat16)
    q = jnp.dot(xb, wq_ref[...], preferred_element_type=jnp.float32) * 0.06
    v = jnp.dot(xb, wv_ref[...],
                preferred_element_type=jnp.float32).astype(jnp.bfloat16)

    # logits^T[i, jj] = K[i] . Q_j[jj]   (NT contraction; no XLU transposes)
    logits_t = lax.dot_general(
        k_ref[...], q.astype(jnp.bfloat16),
        (((1,), (1,)), ((), ())),
        preferred_element_type=jnp.float32)            # (N_pad, TJ) f32

    n_pad = logits_t.shape[0]
    if n_real < n_pad:                                  # static condition
        # mask padded KEY rows so they do not pollute the softmax normalizer;
        # padded QUERY columns are harmless (their V rows are zero).
        key_id = lax.broadcasted_iota(jnp.int32, (n_pad, 1), 0)
        logits_t = jnp.where(key_id < n_real, logits_t, -1e30)

    # softmax over keys (axis 0 here), per query column; EUP reciprocal
    col_max = jnp.max(logits_t, axis=0, keepdims=True)  # (1, TJ)
    e_t = jnp.exp(logits_t - col_max)                   # (N_pad, TJ)
    denom = jnp.sum(e_t, axis=0, keepdims=True)
    e_t = e_t * pl.reciprocal(denom, approx=True)

    # torch: y = (V^T @ att)^T  ->  acc[i, m] += sum_jj att[jj, i] * V_j[jj, m]
    contrib = jnp.dot(e_t.astype(jnp.bfloat16), v,
                      preferred_element_type=jnp.float32)   # (N_pad, M)

    @pl.when(j == 0)
    def _():                                           # direct write: no memset
        acc_ref[...] = contrib

    @pl.when(j > 0)
    def _():
        acc_ref[...] += contrib


# ----------------------------------------------------------------------------
# phase C: epilogue (row-parallel): Wo + residual + LN + ka + ReLU + LN + kd
# ----------------------------------------------------------------------------
def epilogue_kernel(acc_ref, x_ref,                    # (TJ, M) f32 tiles
                    wo_ref,                            # (M, M) bf16
                    gy_ref, by_ref,                    # (1, M) f32
                    wka_ref, bka_ref,                  # (M, H) bf16, (1, H) f32
                    gka_ref, bka2_ref,                 # (1, H) f32
                    wkd_ref, bkd_ref,                  # (1, H), (1, 1) f32
                    out_ref):                          # (1, TJ) f32, lane-dense
    y = jnp.dot(acc_ref[...].astype(jnp.bfloat16), wo_ref[...],
                preferred_element_type=jnp.float32)
    y = y + x_ref[...]

    # LayerNorm (torch.std is unbiased; eps added to std); exact division here
    mfeat = y.shape[-1]
    mu = jnp.mean(y, axis=-1, keepdims=True)
    d = y - mu
    std = jnp.sqrt(jnp.sum(d * d, axis=-1, keepdims=True) * (1.0 / (mfeat - 1)))
    y = gy_ref[...] * d / (std + 1e-6) + by_ref[...]

    h = jnp.dot(y.astype(jnp.bfloat16), wka_ref[...],
                preferred_element_type=jnp.float32) + bka_ref[...]
    h = jnp.maximum(h, 0.0)

    hfeat = h.shape[-1]
    mu2 = jnp.mean(h, axis=-1, keepdims=True)
    d2 = h - mu2
    std2 = jnp.sqrt(jnp.sum(d2 * d2, axis=-1, keepdims=True) * (1.0 / (hfeat - 1)))
    h = gka_ref[...] * d2 / (std2 + 1e-6) + bka2_ref[...]

    # kd head, lane-dense: (1, TJ) = wkd (1,H) contracted with h (TJ,H) over H
    z = lax.dot_general(wkd_ref[...], h, (((1,), (1,)), ((), ())),
                        preferred_element_type=jnp.float32) + bkd_ref[...]
    out_ref[...] = jax.nn.sigmoid(z)


# ----------------------------------------------------------------------------
# wrapper
# ----------------------------------------------------------------------------
def _round_up(a, b):
    return ((a + b - 1) // b) * b


def _vmem_capacity_bytes():
    try:
        cap = getattr(pltpu.get_tpu_info(), "vmem_capacity_bytes", None)
        if cap:
            return int(cap)
    except Exception:
        pass
    return 64 * 2**20            # conservative fallback (v7x per-TC)


def _vmem_limit(est_bytes):
    # ~48 MiB ceiling on v7x (64 MiB physical), ~96 MiB on v5e/v6e (128 MiB)
    ceiling = (_vmem_capacity_bytes() * 3) // 4
    return int(min(max(2 * est_bytes, 16 * 2**20), ceiling))


def vasnet_forward(x, params, *, pos_enc=True, tq=256):
    """x: (batch, seq, dim) f32. Returns (1, batch*seq) f32."""
    b, seq_len, m = x.shape
    if pos_enc:
        x = x + get_position_encoding(seq_len, m)
    xf = x.reshape(-1, m).astype(jnp.float32)           # (N, M)
    n = xf.shape[0]
    h = params["wka"].shape[0]                          # ka out_features

    # --- tile selection: multiple of 128, default 256 (fills the 256-wide
    #     v6e/v7x MXU in both per-tile matmuls); pad N up to a tile multiple ---
    tj = max(128, (int(tq) // 128) * 128)
    tj = min(tj, _round_up(n, 128))
    n_pad = _round_up(n, tj)
    if n_pad != n:
        xf = jnp.pad(xf, ((0, n_pad - n), (0, 0)))
    n_tiles = n_pad // tj

    f32, bf16 = jnp.float32, jnp.bfloat16
    # pre-transpose torch-style (out, in) weights to (in, out); bf16 MXU operands
    wk_t = params["wk"].T.astype(bf16)
    wq_t = params["wq"].T.astype(bf16)
    wv_t = params["wv"].T.astype(bf16)
    wo_t = params["wo"].T.astype(bf16)
    wka_t = params["wka"].T.astype(bf16)
    gy = params["gamma_y"].reshape(1, m).astype(f32)
    by = params["beta_y"].reshape(1, m).astype(f32)
    bka = params["bka"].reshape(1, h).astype(f32)
    gka = params["gamma_ka"].reshape(1, h).astype(f32)
    bka2 = params["beta_ka"].reshape(1, h).astype(f32)
    wkd = params["wkd"].reshape(1, h).astype(f32)
    bkd = params["bkd"].reshape(1, 1).astype(f32)

    # ---------------- phase A: K projection (row-parallel) ----------------
    est_a = 2 * (tj * m * 4) + 2 * (m * m * 2) + 2 * (tj * m * 2) + (1 << 20)
    k_bf16 = pl.pallas_call(
        kproj_kernel,
        out_shape=jax.ShapeDtypeStruct((n_pad, m), bf16),
        grid=(n_tiles,),
        in_specs=[pl.BlockSpec((tj, m), lambda i: (i, 0)),
                  pl.BlockSpec((m, m), lambda i: (0, 0))],
        out_specs=pl.BlockSpec((tj, m), lambda i: (i, 0)),
        compiler_params=pltpu.CompilerParams(
            dimension_semantics=("parallel",),
            vmem_limit_bytes=_vmem_limit(est_a)),
    )(xf, wk_t)

    # ------------- phase B: attention accumulation (reduction) -------------
    est_b = (2 * (tj * m * 4)            # x tile (double-buffered)
             + 2 * (n_pad * m * 2)       # K resident
             + 2 * 2 * (m * m * 2)       # wq, wv
             + 2 * (n_pad * m * 4)       # acc output
             + 3 * (n_pad * tj * 4)      # logits^T / e^T temporaries
             + n_pad * m * 4             # contrib temporary
             + 2 * (tj * m * 4))         # q / v tiles
    acc = pl.pallas_call(
        functools.partial(attn_kernel, n_real=n),
        out_shape=jax.ShapeDtypeStruct((n_pad, m), f32),
        grid=(n_tiles,),
        in_specs=[pl.BlockSpec((tj, m), lambda j: (j, 0)),
                  pl.BlockSpec((n_pad, m), lambda j: (0, 0)),
                  pl.BlockSpec((m, m), lambda j: (0, 0)),
                  pl.BlockSpec((m, m), lambda j: (0, 0))],
        out_specs=pl.BlockSpec((n_pad, m), lambda j: (0, 0)),
        compiler_params=pltpu.CompilerParams(
            dimension_semantics=("arbitrary",),
            vmem_limit_bytes=_vmem_limit(est_b)),
    )(xf, k_bf16, wq_t, wv_t)

    # ----------------- phase C: epilogue (row-parallel) -----------------
    est_c = (2 * 2 * (tj * m * 4)                       # acc, x tiles
             + 2 * (m * m * 2 + m * h * 2)              # wo, wka
             + 2 * (tj * m * 4) + 3 * (tj * h * 4)      # y / h temporaries
             + 2 * (2 * m + 4 * h + 2) * 4 + (1 << 20))
    out = pl.pallas_call(
        epilogue_kernel,
        out_shape=jax.ShapeDtypeStruct((1, n_pad), f32),
        grid=(n_tiles,),
        in_specs=[pl.BlockSpec((tj, m), lambda i: (i, 0)),
                  pl.BlockSpec((tj, m), lambda i: (i, 0)),
                  pl.BlockSpec((m, m), lambda i: (0, 0)),
                  pl.BlockSpec((1, m), lambda i: (0, 0)),
                  pl.BlockSpec((1, m), lambda i: (0, 0)),
                  pl.BlockSpec((m, h), lambda i: (0, 0)),
                  pl.BlockSpec((1, h), lambda i: (0, 0)),
                  pl.BlockSpec((1, h), lambda i: (0, 0)),
                  pl.BlockSpec((1, h), lambda i: (0, 0)),
                  pl.BlockSpec((1, h), lambda i: (0, 0)),
                  pl.BlockSpec((1, 1), lambda i: (0, 0))],
        out_specs=pl.BlockSpec((1, tj), lambda i: (0, i)),
        compiler_params=pltpu.CompilerParams(
            dimension_semantics=("parallel",),
            vmem_limit_bytes=_vmem_limit(est_c)),
    )(acc, xf, wo_t, gy, by, wka_t, bka, gka, bka2, wkd, bkd)

    return out[:, :n]                                    # (1, N)


# ----------------------------------------------------------------------------
# pure-JAX f32 reference (sanity check)
# ----------------------------------------------------------------------------
def vasnet_ref(x, params, *, pos_enc=True):
    b, seq_len, m = x.shape
    if pos_enc:
        x = x + get_position_encoding(seq_len, m)
    xf = x.reshape(-1, m)
    K = xf @ params["wk"].T
    Q = xf @ params["wq"].T * 0.06
    V = xf @ params["wv"].T
    att = jax.nn.softmax(Q @ K.T, axis=-1)
    y = (V.T @ att).T
    y = y @ params["wo"].T
    y = y + xf

    def ln(v, g, bta):
        mean = v.mean(-1, keepdims=True)
        std = jnp.sqrt(((v - mean) ** 2).sum(-1, keepdims=True) / (v.shape[-1] - 1))
        return g * (v - mean) / (std + 1e-6) + bta

    y = ln(y, params["gamma_y"], params["beta_y"])
    y = jnp.maximum(y @ params["wka"].T + params["bka"], 0.0)
    y = ln(y, params["gamma_ka"], params["beta_ka"])
    y = jax.nn.sigmoid(y @ params["wkd"].T + params["bkd"])
    return y.reshape(1, -1)


# ----------------------------------------------------------------------------
# deterministic parameter init (shapes as in VASNetPC.__init__, scaled down)
# ----------------------------------------------------------------------------
def init_params(key, m, hidden):
    keys = jax.random.split(key, 8)
    s = 1.0 / math.sqrt(m)
    sh = 1.0 / math.sqrt(hidden)
    return {
        "wk": jax.random.uniform(keys[0], (m, m), jnp.float32, -s, s),
        "wq": jax.random.uniform(keys[1], (m, m), jnp.float32, -s, s),
        "wv": jax.random.uniform(keys[2], (m, m), jnp.float32, -s, s),
        "wo": jax.random.uniform(keys[3], (m, m), jnp.float32, -s, s),
        "gamma_y": jnp.ones((m,), jnp.float32),
        "beta_y": jnp.zeros((m,), jnp.float32),
        "wka": jax.random.uniform(keys[4], (hidden, m), jnp.float32, -s, s),
        "bka": jax.random.uniform(keys[5], (hidden,), jnp.float32, -s, s),
        "gamma_ka": jnp.ones((hidden,), jnp.float32),
        "beta_ka": jnp.zeros((hidden,), jnp.float32),
        "wkd": jax.random.uniform(keys[6], (1, hidden), jnp.float32, -sh, sh),
        "bkd": jax.random.uniform(keys[7], (1,), jnp.float32, -sh, sh),
    }


if __name__ == "__main__":
    # small shapes: batch=1 (the module's view(-1, m) implies one flattened
    # sequence), seq=320, dim=256, ka hidden=256 (1024 in the original).
    # seq=320 with tq=256 exercises both the multi-tile accumulation path
    # (2 query tiles) and the padded-key masking path (N padded 320 -> 512).
    batch, seq_len, dim = 1, 320, 256
    hidden = 256

    key = jax.random.PRNGKey(0)
    kx, kp = jax.random.split(key)
    x = jax.random.normal(kx, (batch, seq_len, dim), jnp.float32)
    params = init_params(kp, dim, hidden)

    out = jax.block_until_ready(vasnet_forward(x, params, pos_enc=True, tq=256))
    ref = jax.block_until_ready(vasnet_ref(x, params, pos_enc=True))

    assert out.shape == (1, batch * seq_len), out.shape
    err = float(jnp.max(jnp.abs(out - ref)))
    assert err < 3e-2, f"max abs err {err}"   # bf16-MXU / approx-recip tolerance
    print("KERNEL_OK")
</pallas_src>

<mosaic_0001>
module attributes {stable_mosaic.version = 11 : i64} {
  func.func @kproj_kernel(%arg0: i32, %arg1: memref<256x256xf32, #tpu.memory_space<vmem>>, %arg2: memref<256x256xbf16, #tpu.memory_space<vmem>>, %arg3: memref<256x256xbf16, #tpu.memory_space<vmem>>) attributes {dimension_semantics = [#tpu.dimension_semantics<parallel>], iteration_bounds = array<i64: 2>, scalar_prefetch = 0 : i64, scratch_operands = 0 : i64, tpu.core_type = #tpu.core_type<tc>, window_params = [{transform_indices = @transform_0, window_bounds = array<i64: 256, 256>}, {pipeline_mode = #tpu.pipeline_mode<synchronous>, transform_indices = @transform_1, window_bounds = array<i64: 256, 256>}, {transform_indices = @transform_2, window_bounds = array<i64: 256, 256>}]} {
    %c0 = arith.constant 0 : index
    %c0_0 = arith.constant 0 : index
    %0 = vector.load %arg1[%c0, %c0_0] : memref<256x256xf32, #tpu.memory_space<vmem>>, vector<256x256xf32>
    %1 = arith.truncf %0 : vector<256x256xf32> to vector<256x256xbf16>
    %c0_1 = arith.constant 0 : index
    %c0_2 = arith.constant 0 : index
    %2 = vector.load %arg2[%c0_1, %c0_2] : memref<256x256xbf16, #tpu.memory_space<vmem>>, vector<256x256xbf16>
    %cst = arith.constant dense<0.000000e+00> : vector<256x256xf32>
    %3 = tpu.matmul %1, %2, %cst {dimension_numbers = #tpu.dot_dimension_numbers<[1], [0], [0], [1], [0, 0, 1, 1], [], []>} : vector<256x256xbf16>, vector<256x256xbf16>, vector<256x256xf32> -> vector<256x256xf32>
    %4 = arith.truncf %3 : vector<256x256xf32> to vector<256x256xbf16>
    %c0_3 = arith.constant 0 : index
    %c0_4 = arith.constant 0 : index
    %5 = vector.load %arg3[%c0_3, %c0_4] : memref<256x256xbf16, #tpu.memory_space<vmem>>, vector<256x256xbf16>
    tpu.vector_store %arg3[%c0_3, %c0_4], %4 {strides = array<i32>} : memref<256x256xbf16, #tpu.memory_space<vmem>>, vector<256x256xbf16>,
    return
  }
  func.func @transform_0(%arg0: i32) -> (i32, i32) {
    %c0_i32 = arith.constant 0 : i32
    %c0_i32_0 = arith.constant 0 : i32
    return %arg0, %c0_i32 : i32, i32
  }
  func.func @transform_1(%arg0: i32) -> (i32, i32) {
    %c0_i32 = arith.constant 0 : i32
    %c0_i32_0 = arith.constant 0 : i32
    %c0_i32_1 = arith.constant 0 : i32
    return %c0_i32, %c0_i32_0 : i32, i32
  }
  func.func @transform_2(%arg0: i32) -> (i32, i32) {
    %c0_i32 = arith.constant 0 : i32
    %c0_i32_0 = arith.constant 0 : i32
    return %arg0, %c0_i32 : i32, i32
  }
}

</mosaic_0001>

<llo_original>
// kernel: tpu_custom_call.1
$region0: #{tpu_custom_call.1}
  #allocation0 [shape = 'u32[]', space=smem, size = 0x4, offset = 0x4, fixed_abs, tag = 'smem constant byte address 0x4 - core index']
  #allocation1 [shape = 'u32[72,128]{1,0:T(1,128)}', space=vmem, size = 0x9000, scoped, tag = 'internal scratch']
  %s0 = inlined_call_operand.hbm [shape: f32[512,256], index: 0, kind: input, shape index: {}]
  %s1 = inlined_call_operand.hbm [shape: bf16[256,256], index: 1, kind: input, shape index: {}]
  %s2 = inlined_call_operand.hbm [shape: bf16[512,256], index: 2, kind: output, shape index: {}]
  %s3 = sld [smem:[#allocation0]]
  $region49: #{tpu_custom_call.1} parent=0
    _
  %s5 = ssub.s32 1, %s3
  %s6 = scalar_select 0, %s5, %s3
  $region1: #{tpu_custom_call.1} parent=0
    #allocation2 [shape = 'u8[524288]{0}', space=vmem, size = 0x80000, scoped, tag = 'input window, operand 0']
    #allocation3 [shape = 's32[2]{0}', space=sflag, size = 0x8, scoped, tag = 'scoped memory for tpu_custom_call.1']
    #allocation4 [shape = 's32[2]{0}', space=sflag, size = 0x8, scoped, tag = 'scoped memory for tpu_custom_call.1']
    #allocation5 [shape = 'u8[131072]{0}', space=vmem, size = 0x20000, scoped, tag = 'input window, operand 1, single buffered']
    #allocation6 [shape = 's32[1]{0}', space=sflag, size = 0x4, scoped, tag = 'scoped memory for tpu_custom_call.1']
    #allocation7 [shape = 'u8[262144]{0}', space=vmem, size = 0x40000, scoped, tag = 'output window, operand 0']
    %7 = vsyncpa [#allocation3], 0
    %s8 = scalar_lea.sflag [#allocation3], 1
    %9 = vsyncpa %s8, 0
    %10 = vsyncpa [#allocation6], 0
    %11 = vsyncpa [#allocation4], 0
    %s12 = scalar_lea.sflag [#allocation4], 1
    %13 = vsyncpa %s12, 0
    loop: start=0, step=1, limit=4
    $region2: #{tpu_custom_call.1} parent=1 // loop_pre_header
      _
    $region3: #{tpu_custom_call.1} parent=1 // loop_header
      %s15 = sphi 0, %s19
      %p16 = scmp.ge.s32.totalorder %s15, 4
      %s25 = sphi 0, %s27
      %s28 = sphi 0, %s25
      %s29 = sphi 0, %s28
      %s45 = sphi 0, %s29
      %s49 = sphi 0, %s49
      %s51 = sphi 0, %s49
      %s52 = sphi 0, %s51
      %s66 = sphi 0, %s52
      %s72 = sphi 0, %s74
      %s75 = sphi 0, %s72
      %s76 = sphi 0, %s75
      %s92 = sphi 0, %s76
    $region4: #{tpu_custom_call.1} parent=1 // loop_header_branch
      %18 = sbr.rel (%p16) target = $region8
    $region5: #{tpu_custom_call.1} parent=1 // loop_body
      %s20 = ssub.s32 %s15, 1
      %s21 = ssub.s32 %s15, 2
      %s22 = sadd.s32 %s15, 1
      %s23 = ssub.s32 %s15, %s22
      %p24 = scmp.eq.s32.totalorder %s23, 0
      %s26 = sadd.s32 %s25, 1
      %s27 = scalar_select %p24, %s25, %s26
      %p30 = pneg %p24
      %p31 = scmp.eq.s32.totalorder %s15, 1
      %p32 = por %p30, %p31
      %p33 = scmp.ne.s32.totalorder %s25, %s28
      %p34 = scmp.eq.s32.totalorder %s15, 0
      %p35 = por %p33, %p34
      %p36 = scmp.ne.s32.totalorder %s25, %s28
      %p37 = scmp.eq.s32.totalorder %s20, 1
      %p38 = por %p36, %p37
      %p39 = scmp.ne.s32.totalorder %s28, %s29
      %p40 = scmp.eq.s32.totalorder %s20, 0
      %p41 = por %p39, %p40
      %p42 = scmp.ne.s32.totalorder %s28, %s29
      %p43 = scmp.eq.s32.totalorder %s21, 1
      %p44 = por %p42, %p43
      %p46 = scmp.ne.s32.totalorder %s29, %s45
      %p47 = scmp.eq.s32.totalorder %s21, 0
      %p48 = por %p46, %p47
      %s50 = sadd.s32 %s49, 1
      %p53 = scmp.eq.s32.totalorder %s15, 1
      %p54 = scmp.ne.s32.totalorder %s49, %s51
      %p55 = scmp.eq.s32.totalorder %s15, 0
      %p56 = por %p54, %p55
      %p57 = scmp.ne.s32.totalorder %s49, %s51
      %p58 = scmp.eq.s32.totalorder %s20, 1
      %p59 = por %p57, %p58
      %p60 = scmp.ne.s32.totalorder %s51, %s52
      %p61 = scmp.eq.s32.totalorder %s20, 0
      %p62 = por %p60, %p61
      %p63 = scmp.ne.s32.totalorder %s51, %s52
      %p64 = scmp.eq.s32.totalorder %s21, 1
      %p65 = por %p63, %p64
      %p67 = scmp.ne.s32.totalorder %s52, %s66
      %p68 = scmp.eq.s32.totalorder %s21, 0
      %p69 = por %p67, %p68
      %s70 = ssub.s32 %s15, %s22
      %p71 = scmp.eq.s32.totalorder %s70, 0
      %s73 = sadd.s32 %s72, 1
      %s74 = scalar_select %p71, %s72, %s73
      %p77 = pneg %p71
      %p78 = scmp.eq.s32.totalorder %s15, 1
      %p79 = por %p77, %p78
      %p80 = scmp.ne.s32.totalorder %s72, %s75
      %p81 = scmp.eq.s32.totalorder %s15, 0
      %p82 = por %p80, %p81
      %p83 = scmp.ne.s32.totalorder %s72, %s75
      %p84 = scmp.eq.s32.totalorder %s20, 1
      %p85 = por %p83, %p84
      %p86 = scmp.ne.s32.totalorder %s75, %s76
      %p87 = scmp.eq.s32.totalorder %s20, 0
      %p88 = por %p86, %p87
      %p89 = scmp.ne.s32.totalorder %s75, %s76
      %p90 = scmp.eq.s32.totalorder %s21, 1
      %p91 = por %p89, %p90
      %p93 = scmp.ne.s32.totalorder %s76, %s92
      %p94 = scmp.eq.s32.totalorder %s21, 0
      %p95 = por %p93, %p94
      %p96 = scmp.le.s32.totalorder 1, %s15
      %p97 = scmp.lt.s32.totalorder %s15, 3
      %p98 = pnand %p96, %p97
      %p99 = pneg %p98
      // Predicated region
      $region9: #{tpu_custom_call.1} parent=5 // pred_check
        _
      $region10: #{tpu_custom_call.1} parent=5 // pred_check_branch
        %101 = sbr.rel (%p98) target = $region12
      $region11: #{tpu_custom_call.1} parent=5 // pred_region
        %s102 = ssub.s32 %s15, 1
        // Predicated region
        $region13: #{tpu_custom_call.1} parent=11 // pred_check
          %p103 = pneg %p62
        $region14: #{tpu_custom_call.1} parent=11 // pred_check_branch
          %105 = sbr.rel (%p103) target = $region16
        $region15: #{tpu_custom_call.1} parent=11 // pred_region
          %107 = vsyncadd [#allocation6], 0
          %s108 = sshll.u32 %s1, 4
          %s109 = int_to_ptr.hbm [resolvable:$true] %s108
          %s110 = sshll.u32 [#allocation5], 4
          %s111 = int_to_ptr.vmem [resolvable:$true] %s110
          %116 = dma.hbm_to_vmem [thread:$0]  %s109, 4096, %s111, [#allocation6], 128, 128, 8
        $region16: #{tpu_custom_call.1} parent=11 // pred_fallthru
          _
      $region12: #{tpu_custom_call.1} parent=5 // pred_fallthru
        _
      %p117 = scmp.lt.s32.totalorder %s15, 2
      // Predicated region
      $region17: #{tpu_custom_call.1} parent=5 // pred_check
        %p118 = pneg %p117
      $region18: #{tpu_custom_call.1} parent=5 // pred_check_branch
        %120 = sbr.rel (%p118) target = $region20
      $region19: #{tpu_custom_call.1} parent=5 // pred_region
        // Predicated region
        $region21: #{tpu_custom_call.1} parent=19 // pred_check
          %p121 = pneg %p35
        $region22: #{tpu_custom_call.1} parent=19 // pred_check_branch
          %123 = sbr.rel (%p121) target = $region24
        $region23: #{tpu_custom_call.1} parent=19 // pred_region
          %s124 = sand.u32 %s25, 1
          %s125 = scalar_lea.sflag [#allocation3], %s124
          %s126 = sand.u32 %s25, 1
          %s127 = smul.addr %s126, 512
          %s128 = scalar_lea.vmem [#allocation2], %s127
          %s129 = smul.u32 32, %s15
          %131 = vsyncadd %s125, 0
          %s132 = smul.addr %s129, 2
          %s133 = smul.addr %s132, 8
          %s134 = scalar_lea.hbm %s0, %s133
          %s135 = sshll.u32 %s134, 4
          %s136 = int_to_ptr.hbm [resolvable:$true] %s135
          %s137 = sshll.u32 %s128, 4
          %s138 = int_to_ptr.vmem [resolvable:$true] %s137
          %143 = dma.hbm_to_vmem [thread:$0]  %s136, 8192, %s138, %s125, 256, 256, 16
        $region24: #{tpu_custom_call.1} parent=19 // pred_fallthru
          _
      $region20: #{tpu_custom_call.1} parent=5 // pred_fallthru
        _
      %p144 = scmp.le.s32.totalorder 1, %s15
      %p145 = scmp.lt.s32.totalorder %s15, 3
      %p146 = pnand %p144, %p145
      %p147 = pneg %p146
      // Predicated region
      $region25: #{tpu_custom_call.1} parent=5 // pred_check
        _
      $region26: #{tpu_custom_call.1} parent=5 // pred_check_branch
        %149 = sbr.rel (%p146) target = $region28
      $region27: #{tpu_custom_call.1} parent=5 // pred_region
        %s150 = ssub.s32 %s15, 1
        %s151 = sand.u32 %s28, 1
        %s152 = scalar_lea.sflag [#allocation3], %s151
        %s153 = sand.u32 %s28, 1
        %s154 = smul.addr %s153, 512
        %s155 = scalar_lea.vmem [#allocation2], %s154
        // Predicated region
        $region29: #{tpu_custom_call.1} parent=27 // pred_check
          %p156 = pneg %p41
        $region30: #{tpu_custom_call.1} parent=27 // pred_check_branch
          %158 = sbr.rel (%p156) target = $region32
        $region31: #{tpu_custom_call.1} parent=27 // pred_region
          %160 = dma.done %s152, 8192
        $region32: #{tpu_custom_call.1} parent=27 // pred_fallthru
          _
        // Predicated region
        $region33: #{tpu_custom_call.1} parent=27 // pred_check
          %p161 = pneg %p62
        $region34: #{tpu_custom_call.1} parent=27 // pred_check_branch
          %163 = sbr.rel (%p161) target = $region36
        $region35: #{tpu_custom_call.1} parent=27 // pred_region
          %165 = dma.done [#allocation6], 4096
        $region36: #{tpu_custom_call.1} parent=27 // pred_fallthru
          _
        %s166 = sand.u32 %s28, 1
        %s167 = scalar_lea.sflag [#allocation3], %s166
        %s168 = sand.u32 %s28, 1
        %s169 = smul.addr %s168, 512
        %s170 = scalar_lea.vmem [#allocation2], %s169
        %p171 = pneg %p41
        %p172 = pneg %p38
        %p173 = pneg %p62
        %p174 = pneg %p59
        %p175 = pneg %p88
        %p176 = pneg %p85
        %s177 = sand.u32 %s75, 1
        %s178 = scalar_lea.sflag [#allocation4], %s177
        %s179 = sand.u32 %s75, 1
        %s180 = smul.addr %s179, 256
        %s181 = scalar_lea.vmem [#allocation7], %s180
        %s182 = smul.u32 32, %s20
        %s183 = smul.u32 32, %s20
        %v184 = vld [vmem:[%s155] sm:$0xff]
        %v185 = vld [vmem:[%s155 + $0x8] sm:$0xff]
        %v186 = vld [vmem:[%s155 + $0x10] sm:$0xff]
        %v187 = vld [vmem:[%s155 + $0x18] sm:$0xff]
        %v188 = vld [vmem:[%s155 + $0x20] sm:$0xff]
        %v189 = vld [vmem:[%s155 + $0x28] sm:$0xff]
        %v190 = vld [vmem:[%s155 + $0x30] sm:$0xff]
        %v191 = vld [vmem:[%s155 + $0x38] sm:$0xff]
        %v192 = vld [vmem:[%s155 + $0x40] sm:$0xff]
        %v193 = vld [vmem:[%s155 + $0x48] sm:$0xff]
        %v194 = vld [vmem:[%s155 + $0x50] sm:$0xff]
        %v195 = vld [vmem:[%s155 + $0x58] sm:$0xff]
        %v196 = vld [vmem:[%s155 + $0x60] sm:$0xff]
        %v197 = vld [vmem:[%s155 + $0x68] sm:$0xff]
        %v198 = vld [vmem:[%s155 + $0x70] sm:$0xff]
        %v199 = vld [vmem:[%s155 + $0x78] sm:$0xff]
        %v200 = vld [vmem:[%s155 + $0x80] sm:$0xff]
        %v201 = vld [vmem:[%s155 + $0x88] sm:$0xff]
        %v202 = vld [vmem:[%s155 + $0x90] sm:$0xff]
        %v203 = vld [vmem:[%s155 + $0x98] sm:$0xff]
        %v204 = vld [vmem:[%s155 + $0xa0] sm:$0xff]
        %v205 = vld [vmem:[%s155 + $0xa8] sm:$0xff]
        %v206 = vld [vmem:[%s155 + $0xb0] sm:$0xff]
        %v207 = vld [vmem:[%s155 + $0xb8] sm:$0xff]
        %v208 = vld [vmem:[%s155 + $0xc0] sm:$0xff]
        %v209 = vld [vmem:[%s155 + $0xc8] sm:$0xff]
        %v210 = vld [vmem:[%s155 + $0xd0] sm:$0xff]
        %v211 = vld [vmem:[%s155 + $0xd8] sm:$0xff]
        %v212 = vld [vmem:[%s155 + $0xe0] sm:$0xff]
        %v213 = vld [vmem:[%s155 + $0xe8] sm:$0xff]
        %v214 = vld [vmem:[%s155 + $0xf0] sm:$0xff]
        %v215 = vld [vmem:[%s155 + $0xf8] sm:$0xff]
        %v216 = vld [vmem:[%s155 + $0x100] sm:$0xff]
        %v217 = vld [vmem:[%s155 + $0x108] sm:$0xff]
        %v218 = vld [vmem:[%s155 + $0x110] sm:$0xff]
        %v219 = vld [vmem:[%s155 + $0x118] sm:$0xff]
        %v220 = vld [vmem:[%s155 + $0x120] sm:$0xff]
        %v221 = vld [vmem:[%s155 + $0x128] sm:$0xff]
        %v222 = vld [vmem:[%s155 + $0x130] sm:$0xff]
        %v223 = vld [vmem:[%s155 + $0x138] sm:$0xff]
        %v224 = vld [vmem:[%s155 + $0x140] sm:$0xff]
        %v225 = vld [vmem:[%s155 + $0x148] sm:$0xff]
        %v226 = vld [vmem:[%s155 + $0x150] sm:$0xff]
        %v227 = vld [vmem:[%s155 + $0x158] sm:$0xff]
        %v228 = vld [vmem:[%s155 + $0x160] sm:$0xff]
        %v229 = vld [vmem:[%s155 + $0x168] sm:$0xff]
        %v230 = vld [vmem:[%s155 + $0x170] sm:$0xff]
        %v231 = vld [vmem:[%s155 + $0x178] sm:$0xff]
        %v232 = vld [vmem:[%s155 + $0x180] sm:$0xff]
        %v233 = vld [vmem:[%s155 + $0x188] sm:$0xff]
        %v234 = vld [vmem:[%s155 + $0x190] sm:$0xff]
        %v235 = vld [vmem:[%s155 + $0x198] sm:$0xff]
        %v236 = vld [vmem:[%s155 + $0x1a0] sm:$0xff]
        %v237 = vld [vmem:[%s155 + $0x1a8] sm:$0xff]
        %v238 = vld [vmem:[%s155 + $0x1b0] sm:$0xff]
        %v239 = vld [vmem:[%s155 + $0x1b8] sm:$0xff]
        %v240 = vld [vmem:[%s155 + $0x1c0] sm:$0xff]
        %v241 = vld [vmem:[%s155 + $0x1c8] sm:$0xff]
        %v242 = vld [vmem:[%s155 + $0x1d0] sm:$0xff]
        %v243 = vld [vmem:[%s155 + $0x1d8] sm:$0xff]
        %v244 = vld [vmem:[%s155 + $0x1e0] sm:$0xff]
        %v245 = vld [vmem:[%s155 + $0x1e8] sm:$0xff]
        %v246 = vld [vmem:[%s155 + $0x1f0] sm:$0xff]
        %v247 = vld [vmem:[%s155 + $0x1f8] sm:$0xff]
        %v248 = vpack.c.bf16 %v186, %v184
        %v249 = vpack.c.bf16 %v187, %v185
        %v250 = vpack.c.bf16 %v190, %v188
        %v251 = vpack.c.bf16 %v191, %v189
        %v252 = vpack.c.bf16 %v194, %v192
        %v253 = vpack.c.bf16 %v195, %v193
        %v254 = vpack.c.bf16 %v198, %v196
        %v255 = vpack.c.bf16 %v199, %v197
        %v256 = vpack.c.bf16 %v202, %v200
        %v257 = vpack.c.bf16 %v203, %v201
        %v258 = vpack.c.bf16 %v206, %v204
        %v259 = vpack.c.bf16 %v207, %v205
        %v260 = vpack.c.bf16 %v210, %v208
        %v261 = vpack.c.bf16 %v211, %v209
        %v262 = vpack.c.bf16 %v214, %v212
        %v263 = vpack.c.bf16 %v215, %v213
        %v264 = vpack.c.bf16 %v218, %v216
        %v265 = vpack.c.bf16 %v219, %v217
        %v266 = vpack.c.bf16 %v222, %v220
        %v267 = vpack.c.bf16 %v223, %v221
        %v268 = vpack.c.bf16 %v226, %v224
        %v269 = vpack.c.bf16 %v227, %v225
        %v270 = vpack.c.bf16 %v230, %v228
        %v271 = vpack.c.bf16 %v231, %v229
        %v272 = vpack.c.bf16 %v234, %v232
        %v273 = vpack.c.bf16 %v235, %v233
        %v274 = vpack.c.bf16 %v238, %v236
        %v275 = vpack.c.bf16 %v239, %v237
        %v276 = vpack.c.bf16 %v242, %v240
        %v277 = vpack.c.bf16 %v243, %v241
        %v278 = vpack.c.bf16 %v246, %v244
        %v279 = vpack.c.bf16 %v247, %v245
        %v280 = vld [vmem:[#allocation5] sm:$0xff]
        %v281 = vld [vmem:[#allocation5 + $0x8] sm:$0xff]
        %v282 = vld [vmem:[#allocation5 + $0x10] sm:$0xff]
        %v283 = vld [vmem:[#allocation5 + $0x18] sm:$0xff]
        %v284 = vld [vmem:[#allocation5 + $0x20] sm:$0xff]
        %v285 = vld [vmem:[#allocation5 + $0x28] sm:$0xff]
        %v286 = vld [vmem:[#allocation5 + $0x30] sm:$0xff]
        %v287 = vld [vmem:[#allocation5 + $0x38] sm:$0xff]
        %v288 = vld [vmem:[#allocation5 + $0x40] sm:$0xff]
        %v289 = vld [vmem:[#allocation5 + $0x48] sm:$0xff]
        %v290 = vld [vmem:[#allocation5 + $0x50] sm:$0xff]
        %v291 = vld [vmem:[#allocation5 + $0x58] sm:$0xff]
        %v292 = vld [vmem:[#allocation5 + $0x60] sm:$0xff]
        %v293 = vld [vmem:[#allocation5 + $0x68] sm:$0xff]
        %v294 = vld [vmem:[#allocation5 + $0x70] sm:$0xff]
        %v295 = vld [vmem:[#allocation5 + $0x78] sm:$0xff]
        %v296 = vld [vmem:[#allocation5 + $0x80] sm:$0xff]
        %v297 = vld [vmem:[#allocation5 + $0x88] sm:$0xff]
        %v298 = vld [vmem:[#allocation5 + $0x90] sm:$0xff]
        %v299 = vld [vmem:[#allocation5 + $0x98] sm:$0xff]
        %v300 = vld [vmem:[#allocation5 + $0xa0] sm:$0xff]
        %v301 = vld [vmem:[#allocation5 + $0xa8] sm:$0xff]
        %v302 = vld [vmem:[#allocation5 + $0xb0] sm:$0xff]
        %v303 = vld [vmem:[#allocation5 + $0xb8] sm:$0xff]
        %v304 = vld [vmem:[#allocation5 + $0xc0] sm:$0xff]
        %v305 = vld [vmem:[#allocation5 + $0xc8] sm:$0xff]
        %v306 = vld [vmem:[#allocation5 + $0xd0] sm:$0xff]
        %v307 = vld [vmem:[#allocation5 + $0xd8] sm:$0xff]
        %v308 = vld [vmem:[#allocation5 + $0xe0] sm:$0xff]
        %v309 = vld [vmem:[#allocation5 + $0xe8] sm:$0xff]
        %v310 = vld [vmem:[#allocation5 + $0xf0] sm:$0xff]
        %v311 = vld [vmem:[#allocation5 + $0xf8] sm:$0xff]
        %v344 = vunpack.c.l.b16 %v280
        %v345 = vunpack.c.h.b16 %v280
        %v346 = vunpack.c.l.b16 %v281
        %v347 = vunpack.c.h.b16 %v281
        %v348 = vunpack.c.l.b16 %v282
        %v349 = vunpack.c.h.b16 %v282
        %v350 = vunpack.c.l.b16 %v283
        %v351 = vunpack.c.h.b16 %v283
        %v352 = vunpack.c.l.b16 %v284
        %v353 = vunpack.c.h.b16 %v284
        %v354 = vunpack.c.l.b16 %v285
        %v355 = vunpack.c.h.b16 %v285
        %v356 = vunpack.c.l.b16 %v286
        %v357 = vunpack.c.h.b16 %v286
        %v358 = vunpack.c.l.b16 %v287
        %v359 = vunpack.c.h.b16 %v287
        %v360 = vunpack.c.l.b16 %v288
        %v361 = vunpack.c.h.b16 %v288
        %v362 = vunpack.c.l.b16 %v289
        %v363 = vunpack.c.h.b16 %v289
        %v364 = vunpack.c.l.b16 %v290
        %v365 = vunpack.c.h.b16 %v290
        %v366 = vunpack.c.l.b16 %v291
        %v367 = vunpack.c.h.b16 %v291
        %v368 = vunpack.c.l.b16 %v292
        %v369 = vunpack.c.h.b16 %v292
        %v370 = vunpack.c.l.b16 %v293
        %v371 = vunpack.c.h.b16 %v293
        %v372 = vunpack.c.l.b16 %v294
        %v373 = vunpack.c.h.b16 %v294
        %v374 = vunpack.c.l.b16 %v295
        %v375 = vunpack.c.h.b16 %v295
        %v376 = vunpack.c.l.b16 %v296
        %v377 = vunpack.c.h.b16 %v296
        %v378 = vunpack.c.l.b16 %v297
        %v379 = vunpack.c.h.b16 %v297
        %v380 = vunpack.c.l.b16 %v298
        %v381 = vunpack.c.h.b16 %v298
        %v382 = vunpack.c.l.b16 %v299
        %v383 = vunpack.c.h.b16 %v299
        %v384 = vunpack.c.l.b16 %v300
        %v385 = vunpack.c.h.b16 %v300
        %v386 = vunpack.c.l.b16 %v301
        %v387 = vunpack.c.h.b16 %v301
        %v388 = vunpack.c.l.b16 %v302
        %v389 = vunpack.c.h.b16 %v302
        %v390 = vunpack.c.l.b16 %v303
        %v391 = vunpack.c.h.b16 %v303
        %v392 = vunpack.c.l.b16 %v304
        %v393 = vunpack.c.h.b16 %v304
        %v394 = vunpack.c.l.b16 %v305
        %v395 = vunpack.c.h.b16 %v305
        %v396 = vunpack.c.l.b16 %v306
        %v397 = vunpack.c.h.b16 %v306
        %v398 = vunpack.c.l.b16 %v307
        %v399 = vunpack.c.h.b16 %v307
        %v400 = vunpack.c.l.b16 %v308
        %v401 = vunpack.c.h.b16 %v308
        %v402 = vunpack.c.l.b16 %v309
        %v403 = vunpack.c.h.b16 %v309
        %v404 = vunpack.c.l.b16 %v310
        %v405 = vunpack.c.h.b16 %v310
        %v406 = vunpack.c.l.b16 %v311
        %v407 = vunpack.c.h.b16 %v311
        %v408 = vpack.c.b16 %v346, %v344
        %v409 = vpack.c.b16 %v347, %v345
        %v410 = vpack.c.b16 %v350, %v348
        %v411 = vpack.c.b16 %v351, %v349
        %v412 = vpack.c.b16 %v354, %v352
        %v413 = vpack.c.b16 %v355, %v353
        %v414 = vpack.c.b16 %v358, %v356
        %v415 = vpack.c.b16 %v359, %v357
        %v416 = vpack.c.b16 %v362, %v360
        %v417 = vpack.c.b16 %v363, %v361
        %v418 = vpack.c.b16 %v366, %v364
        %v419 = vpack.c.b16 %v367, %v365
        %v420 = vpack.c.b16 %v370, %v368
        %v421 = vpack.c.b16 %v371, %v369
        %v422 = vpack.c.b16 %v374, %v372
        %v423 = vpack.c.b16 %v375, %v373
        %v424 = vpack.c.b16 %v378, %v376
        %v425 = vpack.c.b16 %v379, %v377
        %v426 = vpack.c.b16 %v382, %v380
        %v427 = vpack.c.b16 %v383, %v381
        %v428 = vpack.c.b16 %v386, %v384
        %v429 = vpack.c.b16 %v387, %v385
        %v430 = vpack.c.b16 %v390, %v388
        %v431 = vpack.c.b16 %v391, %v389
        %v432 = vpack.c.b16 %v394, %v392
        %v433 = vpack.c.b16 %v395, %v393
        %v434 = vpack.c.b16 %v398, %v396
        %v435 = vpack.c.b16 %v399, %v397
        %v436 = vpack.c.b16 %v402, %v400
        %v437 = vpack.c.b16 %v403, %v401
        %v438 = vpack.c.b16 %v406, %v404
        %v439 = vpack.c.b16 %v407, %v405
        %472 = vmatpush.bf16.msra.mxu0 %v422
        %473 = vmatpush.bf16.msra.mxu0 %v420
        %474 = vmatpush.bf16.msra.mxu0 %v418
        %475 = vmatpush.bf16.msra.mxu0 %v416
        %476 = vmatpush.bf16.msra.mxu0 %v414
        %477 = vmatpush.bf16.msra.mxu0 %v412
        %478 = vmatpush.bf16.msra.mxu0 %v410
        %479 = vmatpush.bf16.msra.mxu0 %v408
        %480 = vmatmul.bf16.gmra.mxu0 %v248
        %v481 = vpop.f32.mrf.mxu0
        %v482 = vadd.f32 0.0, %v481
        %v483 = vpop.f32.mrf.mxu0
        %v484 = vadd.f32 0.0, %v483
        %485 = vmatmul.bf16.gmra.mxu0 %v250
        %v486 = vpop.f32.mrf.mxu0
        %v487 = vadd.f32 0.0, %v486
        %v488 = vpop.f32.mrf.mxu0
        %v489 = vadd.f32 0.0, %v488
        %490 = vmatmul.bf16.gmra.mxu0 %v252
        %v491 = vpop.f32.mrf.mxu0
        %v492 = vadd.f32 0.0, %v491
        %v493 = vpop.f32.mrf.mxu0
        %v494 = vadd.f32 0.0, %v493
        %495 = vmatmul.bf16.gmra.mxu0 %v254
        %v496 = vpop.f32.mrf.mxu0
        %v497 = vadd.f32 0.0, %v496
        %v498 = vpop.f32.mrf.mxu0
        %v499 = vadd.f32 0.0, %v498
        %500 = vmatmul.bf16.gmra.mxu0 %v256
        %v501 = vpop.f32.mrf.mxu0
        %v502 = vadd.f32 0.0, %v501
        %v503 = vpop.f32.mrf.mxu0
        %v504 = vadd.f32 0.0, %v503
        %505 = vmatmul.bf16.gmra.mxu0 %v258
        %v506 = vpop.f32.mrf.mxu0
        %v507 = vadd.f32 0.0, %v506
        %v508 = vpop.f32.mrf.mxu0
        %v509 = vadd.f32 0.0, %v508
        %510 = vmatmul.bf16.gmra.mxu0 %v260
        %v511 = vpop.f32.mrf.mxu0
        %v512 = vadd.f32 0.0, %v511
        %v513 = vpop.f32.mrf.mxu0
        %v514 = vadd.f32 0.0, %v513
        %515 = vmatmul.bf16.gmra.mxu0 %v262
        %v516 = vpop.f32.mrf.mxu0
        %v517 = vadd.f32 0.0, %v516
        %v518 = vpop.f32.mrf.mxu0
        %v519 = vadd.f32 0.0, %v518
        %520 = vmatmul.bf16.gmra.mxu0 %v264
        %v521 = vpop.f32.mrf.mxu0
        %v522 = vadd.f32 0.0, %v521
        %v523 = vpop.f32.mrf.mxu0
        %v524 = vadd.f32 0.0, %v523
        %525 = vmatmul.bf16.gmra.mxu0 %v266
        %v526 = vpop.f32.mrf.mxu0
        %v527 = vadd.f32 0.0, %v526
        %v528 = vpop.f32.mrf.mxu0
        %v529 = vadd.f32 0.0, %v528
        %530 = vmatmul.bf16.gmra.mxu0 %v268
        %v531 = vpop.f32.mrf.mxu0
        %v532 = vadd.f32 0.0, %v531
        %v533 = vpop.f32.mrf.mxu0
        %v534 = vadd.f32 0.0, %v533
        %535 = vmatmul.bf16.gmra.mxu0 %v270
        %v536 = vpop.f32.mrf.mxu0
        %v537 = vadd.f32 0.0, %v536
        %v538 = vpop.f32.mrf.mxu0
        %v539 = vadd.f32 0.0, %v538
        %540 = vmatmul.bf16.gmra.mxu0 %v272
        %v541 = vpop.f32.mrf.mxu0
        %v542 = vadd.f32 0.0, %v541
        %v543 = vpop.f32.mrf.mxu0
        %v544 = vadd.f32 0.0, %v543
        %545 = vmatmul.bf16.gmra.mxu0 %v274
        %v546 = vpop.f32.mrf.mxu0
        %v547 = vadd.f32 0.0, %v546
        %v548 = vpop.f32.mrf.mxu0
        %v549 = vadd.f32 0.0, %v548
        %550 = vmatmul.bf16.gmra.mxu0 %v276
        %v551 = vpop.f32.mrf.mxu0
        %v552 = vadd.f32 0.0, %v551
        %v553 = vpop.f32.mrf.mxu0
        %v554 = vadd.f32 0.0, %v553
        %555 = vmatmul.bf16.gmra.mxu0 %v278
        %v556 = vpop.f32.mrf.mxu0
        %v557 = vadd.f32 0.0, %v556
        %v558 = vpop.f32.mrf.mxu0
        %v559 = vadd.f32 0.0, %v558
        %560 = vdwg.mxu0
        %561 = vmatpush.bf16.msra.mxu0 %v438
        %562 = vmatpush.bf16.msra.mxu0 %v436
        %563 = vmatpush.bf16.msra.mxu0 %v434
        %564 = vmatpush.bf16.msra.mxu0 %v432
        %565 = vmatpush.bf16.msra.mxu0 %v430
        %566 = vmatpush.bf16.msra.mxu0 %v428
        %567 = vmatpush.bf16.msra.mxu0 %v426
        %568 = vmatpush.bf16.msra.mxu0 %v424
        %569 = vmatmul.bf16.gmra.mxu0 %v249
        %v570 = vpop.f32.mrf.mxu0
        %v571 = vadd.f32 %v482, %v570
        %v572 = vpop.f32.mrf.mxu0
        %v573 = vadd.f32 %v484, %v572
        %574 = vmatmul.bf16.gmra.mxu0 %v251
        %v575 = vpop.f32.mrf.mxu0
        %v576 = vadd.f32 %v487, %v575
        %v577 = vpop.f32.mrf.mxu0
        %v578 = vadd.f32 %v489, %v577
        %579 = vmatmul.bf16.gmra.mxu0 %v253
        %v580 = vpop.f32.mrf.mxu0
        %v581 = vadd.f32 %v492, %v580
        %v582 = vpop.f32.mrf.mxu0
        %v583 = vadd.f32 %v494, %v582
        %584 = vmatmul.bf16.gmra.mxu0 %v255
        %v585 = vpop.f32.mrf.mxu0
        %v586 = vadd.f32 %v497, %v585
        %v587 = vpop.f32.mrf.mxu0
        %v588 = vadd.f32 %v499, %v587
        %589 = vmatmul.bf16.gmra.mxu0 %v257
        %v590 = vpop.f32.mrf.mxu0
        %v591 = vadd.f32 %v502, %v590
        %v592 = vpop.f32.mrf.mxu0
        %v593 = vadd.f32 %v504, %v592
        %594 = vmatmul.bf16.gmra.mxu0 %v259
        %v595 = vpop.f32.mrf.mxu0
        %v596 = vadd.f32 %v507, %v595
        %v597 = vpop.f32.mrf.mxu0
        %v598 = vadd.f32 %v509, %v597
        %599 = vmatmul.bf16.gmra.mxu0 %v261
        %v600 = vpop.f32.mrf.mxu0
        %v601 = vadd.f32 %v512, %v600
        %v602 = vpop.f32.mrf.mxu0
        %v603 = vadd.f32 %v514, %v602
        %604 = vmatmul.bf16.gmra.mxu0 %v263
        %v605 = vpop.f32.mrf.mxu0
        %v606 = vadd.f32 %v517, %v605
        %v607 = vpop.f32.mrf.mxu0
        %v608 = vadd.f32 %v519, %v607
        %609 = vmatmul.bf16.gmra.mxu0 %v265
        %v610 = vpop.f32.mrf.mxu0
        %v611 = vadd.f32 %v522, %v610
        %v612 = vpop.f32.mrf.mxu0
        %v613 = vadd.f32 %v524, %v612
        %614 = vmatmul.bf16.gmra.mxu0 %v267
        %v615 = vpop.f32.mrf.mxu0
        %v616 = vadd.f32 %v527, %v615
        %v617 = vpop.f32.mrf.mxu0
        %v618 = vadd.f32 %v529, %v617
        %619 = vmatmul.bf16.gmra.mxu0 %v269
        %v620 = vpop.f32.mrf.mxu0
        %v621 = vadd.f32 %v532, %v620
        %v622 = vpop.f32.mrf.mxu0
        %v623 = vadd.f32 %v534, %v622
        %624 = vmatmul.bf16.gmra.mxu0 %v271
        %v625 = vpop.f32.mrf.mxu0
        %v626 = vadd.f32 %v537, %v625
        %v627 = vpop.f32.mrf.mxu0
        %v628 = vadd.f32 %v539, %v627
        %629 = vmatmul.bf16.gmra.mxu0 %v273
        %v630 = vpop.f32.mrf.mxu0
        %v631 = vadd.f32 %v542, %v630
        %v632 = vpop.f32.mrf.mxu0
        %v633 = vadd.f32 %v544, %v632
        %634 = vmatmul.bf16.gmra.mxu0 %v275
        %v635 = vpop.f32.mrf.mxu0
        %v636 = vadd.f32 %v547, %v635
        %v637 = vpop.f32.mrf.mxu0
        %v638 = vadd.f32 %v549, %v637
        %639 = vmatmul.bf16.gmra.mxu0 %v277
        %v640 = vpop.f32.mrf.mxu0
        %v641 = vadd.f32 %v552, %v640
        %v642 = vpop.f32.mrf.mxu0
        %v643 = vadd.f32 %v554, %v642
        %644 = vmatmul.bf16.gmra.mxu0 %v279
        %v645 = vpop.f32.mrf.mxu0
        %v646 = vadd.f32 %v557, %v645
        %v647 = vpop.f32.mrf.mxu0
        %v648 = vadd.f32 %v559, %v647
        %649 = vdwg.mxu0
        %650 = vmatpush.bf16.msra.mxu0 %v423
        %651 = vmatpush.bf16.msra.mxu0 %v421
        %652 = vmatpush.bf16.msra.mxu0 %v419
        %653 = vmatpush.bf16.msra.mxu0 %v417
        %654 = vmatpush.bf16.msra.mxu0 %v415
        %655 = vmatpush.bf16.msra.mxu0 %v413
        %656 = vmatpush.bf16.msra.mxu0 %v411
        %657 = vmatpush.bf16.msra.mxu0 %v409
        %658 = vmatmul.bf16.gmra.mxu0 %v248
        %v659 = vpop.f32.mrf.mxu0
        %v660 = vadd.f32 0.0, %v659
        %v661 = vpop.f32.mrf.mxu0
        %v662 = vadd.f32 0.0, %v661
        %663 = vmatmul.bf16.gmra.mxu0 %v250
        %v664 = vpop.f32.mrf.mxu0
        %v665 = vadd.f32 0.0, %v664
        %v666 = vpop.f32.mrf.mxu0
        %v667 = vadd.f32 0.0, %v666
        %668 = vmatmul.bf16.gmra.mxu0 %v252
        %v669 = vpop.f32.mrf.mxu0
        %v670 = vadd.f32 0.0, %v669
        %v671 = vpop.f32.mrf.mxu0
        %v672 = vadd.f32 0.0, %v671
        %673 = vmatmul.bf16.gmra.mxu0 %v254
        %v674 = vpop.f32.mrf.mxu0
        %v675 = vadd.f32 0.0, %v674
        %v676 = vpop.f32.mrf.mxu0
        %v677 = vadd.f32 0.0, %v676
        %678 = vmatmul.bf16.gmra.mxu0 %v256
        %v679 = vpop.f32.mrf.mxu0
        %v680 = vadd.f32 0.0, %v679
        %v681 = vpop.f32.mrf.mxu0
        %v682 = vadd.f32 0.0, %v681
        %683 = vmatmul.bf16.gmra.mxu0 %v258
        %v684 = vpop.f32.mrf.mxu0
        %v685 = vadd.f32 0.0, %v684
        %v686 = vpop.f32.mrf.mxu0
        %v687 = vadd.f32 0.0, %v686
        %688 = vmatmul.bf16.gmra.mxu0 %v260
        %v689 = vpop.f32.mrf.mxu0
        %v690 = vadd.f32 0.0, %v689
        %v691 = vpop.f32.mrf.mxu0
        %v692 = vadd.f32 0.0, %v691
        %693 = vmatmul.bf16.gmra.mxu0 %v262
        %v694 = vpop.f32.mrf.mxu0
        %v695 = vadd.f32 0.0, %v694
        %v696 = vpop.f32.mrf.mxu0
        %v697 = vadd.f32 0.0, %v696
        %698 = vmatmul.bf16.gmra.mxu0 %v264
        %v699 = vpop.f32.mrf.mxu0
        %v700 = vadd.f32 0.0, %v699
        %v701 = vpop.f32.mrf.mxu0
        %v702 = vadd.f32 0.0, %v701
        %703 = vmatmul.bf16.gmra.mxu0 %v266
        %v704 = vpop.f32.mrf.mxu0
        %v705 = vadd.f32 0.0, %v704
        %v706 = vpop.f32.mrf.mxu0
        %v707 = vadd.f32 0.0, %v706
        %708 = vmatmul.bf16.gmra.mxu0 %v268
        %v709 = vpop.f32.mrf.mxu0
        %v710 = vadd.f32 0.0, %v709
        %v711 = vpop.f32.mrf.mxu0
        %v712 = vadd.f32 0.0, %v711
        %713 = vmatmul.bf16.gmra.mxu0 %v270
        %v714 = vpop.f32.mrf.mxu0
        %v715 = vadd.f32 0.0, %v714
        %v716 = vpop.f32.mrf.mxu0
        %v717 = vadd.f32 0.0, %v716
        %718 = vmatmul.bf16.gmra.mxu0 %v272
        %v719 = vpop.f32.mrf.mxu0
        %v720 = vadd.f32 0.0, %v719
        %v721 = vpop.f32.mrf.mxu0
        %v722 = vadd.f32 0.0, %v721
        %723 = vmatmul.bf16.gmra.mxu0 %v274
        %v724 = vpop.f32.mrf.mxu0
        %v725 = vadd.f32 0.0, %v724
        %v726 = vpop.f32.mrf.mxu0
        %v727 = vadd.f32 0.0, %v726
        %728 = vmatmul.bf16.gmra.mxu0 %v276
        %v729 = vpop.f32.mrf.mxu0
        %v730 = vadd.f32 0.0, %v729
        %v731 = vpop.f32.mrf.mxu0
        %v732 = vadd.f32 0.0, %v731
        %733 = vmatmul.bf16.gmra.mxu0 %v278
        %v734 = vpop.f32.mrf.mxu0
        %v735 = vadd.f32 0.0, %v734
        %v736 = vpop.f32.mrf.mxu0
        %v737 = vadd.f32 0.0, %v736
        %738 = vdwg.mxu0
        %739 = vmatpush.bf16.msra.mxu0 %v439
        %740 = vmatpush.bf16.msra.mxu0 %v437
        %741 = vmatpush.bf16.msra.mxu0 %v435
        %742 = vmatpush.bf16.msra.mxu0 %v433
        %743 = vmatpush.bf16.msra.mxu0 %v431
        %744 = vmatpush.bf16.msra.mxu0 %v429
        %745 = vmatpush.bf16.msra.mxu0 %v427
        %746 = vmatpush.bf16.msra.mxu0 %v425
        %747 = vmatmul.bf16.gmra.mxu0 %v249
        %v748 = vpop.f32.mrf.mxu0
        %v749 = vadd.f32 %v660, %v748
        %v750 = vpop.f32.mrf.mxu0
        %v751 = vadd.f32 %v662, %v750
        %752 = vmatmul.bf16.gmra.mxu0 %v251
        %v753 = vpop.f32.mrf.mxu0
        %v754 = vadd.f32 %v665, %v753
        %v755 = vpop.f32.mrf.mxu0
        %v756 = vadd.f32 %v667, %v755
        %757 = vmatmul.bf16.gmra.mxu0 %v253
        %v758 = vpop.f32.mrf.mxu0
        %v759 = vadd.f32 %v670, %v758
        %v760 = vpop.f32.mrf.mxu0
        %v761 = vadd.f32 %v672, %v760
        %762 = vmatmul.bf16.gmra.mxu0 %v255
        %v763 = vpop.f32.mrf.mxu0
        %v764 = vadd.f32 %v675, %v763
        %v765 = vpop.f32.mrf.mxu0
        %v766 = vadd.f32 %v677, %v765
        %767 = vmatmul.bf16.gmra.mxu0 %v257
        %v768 = vpop.f32.mrf.mxu0
        %v769 = vadd.f32 %v680, %v768
        %v770 = vpop.f32.mrf.mxu0
        %v771 = vadd.f32 %v682, %v770
        %772 = vmatmul.bf16.gmra.mxu0 %v259
        %v773 = vpop.f32.mrf.mxu0
        %v774 = vadd.f32 %v685, %v773
        %v775 = vpop.f32.mrf.mxu0
        %v776 = vadd.f32 %v687, %v775
        %777 = vmatmul.bf16.gmra.mxu0 %v261
        %v778 = vpop.f32.mrf.mxu0
        %v779 = vadd.f32 %v690, %v778
        %v780 = vpop.f32.mrf.mxu0
        %v781 = vadd.f32 %v692, %v780
        %782 = vmatmul.bf16.gmra.mxu0 %v263
        %v783 = vpop.f32.mrf.mxu0
        %v784 = vadd.f32 %v695, %v783
        %v785 = vpop.f32.mrf.mxu0
        %v786 = vadd.f32 %v697, %v785
        %787 = vmatmul.bf16.gmra.mxu0 %v265
        %v788 = vpop.f32.mrf.mxu0
        %v789 = vadd.f32 %v700, %v788
        %v790 = vpop.f32.mrf.mxu0
        %v791 = vadd.f32 %v702, %v790
        %792 = vmatmul.bf16.gmra.mxu0 %v267
        %v793 = vpop.f32.mrf.mxu0
        %v794 = vadd.f32 %v705, %v793
        %v795 = vpop.f32.mrf.mxu0
        %v796 = vadd.f32 %v707, %v795
        %797 = vmatmul.bf16.gmra.mxu0 %v269
        %v798 = vpop.f32.mrf.mxu0
        %v799 = vadd.f32 %v710, %v798
        %v800 = vpop.f32.mrf.mxu0
        %v801 = vadd.f32 %v712, %v800
        %802 = vmatmul.bf16.gmra.mxu0 %v271
        %v803 = vpop.f32.mrf.mxu0
        %v804 = vadd.f32 %v715, %v803
        %v805 = vpop.f32.mrf.mxu0
        %v806 = vadd.f32 %v717, %v805
        %807 = vmatmul.bf16.gmra.mxu0 %v273
        %v808 = vpop.f32.mrf.mxu0
        %v809 = vadd.f32 %v720, %v808
        %v810 = vpop.f32.mrf.mxu0
        %v811 = vadd.f32 %v722, %v810
        %812 = vmatmul.bf16.gmra.mxu0 %v275
        %v813 = vpop.f32.mrf.mxu0
        %v814 = vadd.f32 %v725, %v813
        %v815 = vpop.f32.mrf.mxu0
        %v816 = vadd.f32 %v727, %v815
        %817 = vmatmul.bf16.gmra.mxu0 %v277
        %v818 = vpop.f32.mrf.mxu0
        %v819 = vadd.f32 %v730, %v818
        %v820 = vpop.f32.mrf.mxu0
        %v821 = vadd.f32 %v732, %v820
        %822 = vmatmul.bf16.gmra.mxu0 %v279
        %v823 = vpop.f32.mrf.mxu0
        %v824 = vadd.f32 %v735, %v823
        %v825 = vpop.f32.mrf.mxu0
        %v826 = vadd.f32 %v737, %v825
        %827 = vdwg.mxu0
        %v828 = vpack.c.bf16 %v749, %v571
        %v829 = vpack.c.bf16 %v751, %v573
        %v830 = vpack.c.bf16 %v754, %v576
        %v831 = vpack.c.bf16 %v756, %v578
        %v832 = vpack.c.bf16 %v759, %v581
        %v833 = vpack.c.bf16 %v761, %v583
        %v834 = vpack.c.bf16 %v764, %v586
        %v835 = vpack.c.bf16 %v766, %v588
        %v836 = vpack.c.bf16 %v769, %v591
        %v837 = vpack.c.bf16 %v771, %v593
        %v838 = vpack.c.bf16 %v774, %v596
        %v839 = vpack.c.bf16 %v776, %v598
        %v840 = vpack.c.bf16 %v779, %v601
        %v841 = vpack.c.bf16 %v781, %v603
        %v842 = vpack.c.bf16 %v784, %v606
        %v843 = vpack.c.bf16 %v786, %v608
        %v844 = vpack.c.bf16 %v789, %v611
        %v845 = vpack.c.bf16 %v791, %v613
        %v846 = vpack.c.bf16 %v794, %v616
        %v847 = vpack.c.bf16 %v796, %v618
        %v848 = vpack.c.bf16 %v799, %v621
        %v849 = vpack.c.bf16 %v801, %v623
        %v850 = vpack.c.bf16 %v804, %v626
        %v851 = vpack.c.bf16 %v806, %v628
        %v852 = vpack.c.bf16 %v809, %v631
        %v853 = vpack.c.bf16 %v811, %v633
        %v854 = vpack.c.bf16 %v814, %v636
        %v855 = vpack.c.bf16 %v816, %v638
        %v856 = vpack.c.bf16 %v819, %v641
        %v857 = vpack.c.bf16 %v821, %v643
        %v858 = vpack.c.bf16 %v824, %v646
        %v859 = vpack.c.bf16 %v826, %v648
        %860 = vst [vmem:[%s181] sm:$0xff] %v828
        %861 = vst [vmem:[%s181 + $0x8] sm:$0xff] %v829
        %862 = vst [vmem:[%s181 + $0x10] sm:$0xff] %v830
        %863 = vst [vmem:[%s181 + $0x18] sm:$0xff] %v831
        %864 = vst [vmem:[%s181 + $0x20] sm:$0xff] %v832
        %865 = vst [vmem:[%s181 + $0x28] sm:$0xff] %v833
        %866 = vst [vmem:[%s181 + $0x30] sm:$0xff] %v834
        %867 = vst [vmem:[%s181 + $0x38] sm:$0xff] %v835
        %868 = vst [vmem:[%s181 + $0x40] sm:$0xff] %v836
        %869 = vst [vmem:[%s181 + $0x48] sm:$0xff] %v837
        %870 = vst [vmem:[%s181 + $0x50] sm:$0xff] %v838
        %871 = vst [vmem:[%s181 + $0x58] sm:$0xff] %v839
        %872 = vst [vmem:[%s181 + $0x60] sm:$0xff] %v840
        %873 = vst [vmem:[%s181 + $0x68] sm:$0xff] %v841
        %874 = vst [vmem:[%s181 + $0x70] sm:$0xff] %v842
        %875 = vst [vmem:[%s181 + $0x78] sm:$0xff] %v843
        %876 = vst [vmem:[%s181 + $0x80] sm:$0xff] %v844
        %877 = vst [vmem:[%s181 + $0x88] sm:$0xff] %v845
        %878 = vst [vmem:[%s181 + $0x90] sm:$0xff] %v846
        %879 = vst [vmem:[%s181 + $0x98] sm:$0xff] %v847
        %880 = vst [vmem:[%s181 + $0xa0] sm:$0xff] %v848
        %881 = vst [vmem:[%s181 + $0xa8] sm:$0xff] %v849
        %882 = vst [vmem:[%s181 + $0xb0] sm:$0xff] %v850
        %883 = vst [vmem:[%s181 + $0xb8] sm:$0xff] %v851
        %884 = vst [vmem:[%s181 + $0xc0] sm:$0xff] %v852
        %885 = vst [vmem:[%s181 + $0xc8] sm:$0xff] %v853
        %886 = vst [vmem:[%s181 + $0xd0] sm:$0xff] %v854
        %887 = vst [vmem:[%s181 + $0xd8] sm:$0xff] %v855
        %888 = vst [vmem:[%s181 + $0xe0] sm:$0xff] %v856
        %889 = vst [vmem:[%s181 + $0xe8] sm:$0xff] %v857
        %890 = vst [vmem:[%s181 + $0xf0] sm:$0xff] %v858
        %891 = vst [vmem:[%s181 + $0xf8] sm:$0xff] %v859
        %s892 = sand.u32 %s75, 1
        %s893 = scalar_lea.sflag [#allocation4], %s892
        %s894 = sand.u32 %s75, 1
        %s895 = smul.addr %s894, 256
        %s896 = scalar_lea.vmem [#allocation7], %s895
        // Predicated region
        $region37: #{tpu_custom_call.1} parent=27 // pred_check
          %p897 = pneg %p85
        $region38: #{tpu_custom_call.1} parent=27 // pred_check_branch
          %899 = sbr.rel (%p897) target = $region40
        $region39: #{tpu_custom_call.1} parent=27 // pred_region
          %s900 = smul.u32 32, %s20
          %902 = vsyncadd %s893, 0
          %s903 = smul.addr %s900, 2
          %s904 = smul.addr %s903, 4
          %s905 = scalar_lea.hbm %s2, %s904
          %s906 = sshll.u32 %s896, 4
          %s907 = int_to_ptr.vmem [resolvable:$true] %s906
          %s908 = sshll.u32 %s905, 4
          %s909 = int_to_ptr.hbm [resolvable:$true] %s908
          %914 = dma.vmem_to_hbm [thread:$0]  %s907, 4096, %s909, %s893, 128, 128, 8
        $region40: #{tpu_custom_call.1} parent=27 // pred_fallthru
          _
      $region28: #{tpu_custom_call.1} parent=5 // pred_fallthru
        _
      %p915 = scmp.le.s32.totalorder 2, %s15
      // Predicated region
      $region41: #{tpu_custom_call.1} parent=5 // pred_check
        %p916 = pneg %p915
      $region42: #{tpu_custom_call.1} parent=5 // pred_check_branch
        %918 = sbr.rel (%p916) target = $region44
      $region43: #{tpu_custom_call.1} parent=5 // pred_region
        %s919 = ssub.s32 %s15, 2
        // Predicated region
        $region45: #{tpu_custom_call.1} parent=43 // pred_check
          %p920 = pneg %p91
        $region46: #{tpu_custom_call.1} parent=43 // pred_check_branch
          %922 = sbr.rel (%p920) target = $region48
        $region47: #{tpu_custom_call.1} parent=43 // pred_region
          %s923 = sand.u32 %s76, 1
          %s924 = scalar_lea.sflag [#allocation4], %s923
          %s925 = sand.u32 %s76, 1
          %s926 = smul.addr %s925, 256
          %s927 = scalar_lea.vmem [#allocation7], %s926
          %929 = dma.done %s924, 4096
        $region48: #{tpu_custom_call.1} parent=43 // pred_fallthru
          _
      $region44: #{tpu_custom_call.1} parent=5 // pred_fallthru
        _
    $region6: #{tpu_custom_call.1} parent=1 // loop_footer
      %s19 = sadd.s32 1, %s15
    $region7: #{tpu_custom_call.1} parent=1 // loop_footer_branch
      %14 = sbr.rel target = $region3
    $region8: #{tpu_custom_call.1} parent=1 // loop_exit
      _
    %930 = vsyncpa [#allocation3], 1
    %s931 = scalar_lea.sflag [#allocation3], 1
    %932 = vsyncpa %s931, 1
    %933 = vsyncpa [#allocation6], 1
    %934 = vsyncpa [#allocation4], 1
    %s935 = scalar_lea.sflag [#allocation4], 1
    %936 = vsyncpa %s935, 1

</llo_original>
